<compile_context>
chip_gen: v6e
topology: v6e:2x2x1
jax: 0.10.0
libtpu: 0.0.40
codegen_flags: <defaults>
</compile_context>

<pallas_src>
import functools

import jax
import jax.numpy as jnp
from jax.experimental import pallas as pl
from jax.experimental.pallas import tpu as pltpu


def _fm_kernel(x_ref, o_ref, *, reduce_sum: bool, num_fields: int):
    # x_ref: (TB, F, D) block in VMEM.
    # Accumulate sum and sum-of-squares over the (small, static) field axis
    # with cheap VALU adds; accumulation is in f32 regardless of input dtype.
    x0 = x_ref[:, 0, :].astype(jnp.float32)
    s = x0                      # running sum over fields        (TB, D)
    ss = x0 * x0                # running sum of squared fields  (TB, D)
    for f in range(1, num_fields):
        xf = x_ref[:, f, :].astype(jnp.float32)
        s = s + xf
        ss = ss + xf * xf
    ix = s * s - ss             # square_of_sum - sum_of_square  (TB, D)
    if reduce_sum:
        out = 0.5 * jnp.sum(ix, axis=1, keepdims=True)   # (TB, 1)
    else:
        out = 0.5 * ix                                    # (TB, D)
    o_ref[...] = out.astype(o_ref.dtype)


def _pad_up(v: int, m: int) -> int:
    return (v + m - 1) // m * m


def _choose_block_b(b: int, f: int, d: int, itemsize: int) -> int:
    """Pick a batch tile that keeps the double-buffered input under budget."""
    # sublane packing factor for the second-to-last dim depends on dtype width
    sublane = {4: 8, 2: 16, 1: 32}.get(itemsize, 8)
    # per-batch-row VMEM footprint of the (F, D) slab, including (8,128) padding
    per_row = _pad_up(f, sublane) * _pad_up(d, 128) * itemsize
    budget = 24 * 1024 * 1024          # input double-buffer budget (v7x-safe)
    tb = budget // (2 * per_row)
    tb = min(tb, 1024, b)              # >=512 is the sweet spot; 1024 caps temps
    if tb >= b:
        return b                       # single/last-block == full batch dim
    return max(8, (tb // 8) * 8)       # keep second-to-last output dim 8-aligned


def fm_operation(x: jax.Array, reduce_sum: bool = True,
                 block_b: int | None = None) -> jax.Array:
    """Pallas implementation of FM_operation.forward.

    x: float array of shape (batch_size, num_fields, embed_dim).
    Returns (batch_size, 1) if reduce_sum else (batch_size, embed_dim).
    """
    b, f, d = x.shape
    itemsize = jnp.dtype(x.dtype).itemsize
    tb = block_b if block_b is not None else _choose_block_b(b, f, d, itemsize)
    tb = min(tb, b)

    out_cols = 1 if reduce_sum else d
    out_shape = jax.ShapeDtypeStruct((b, out_cols), x.dtype)
    grid = (pl.cdiv(b, tb),)

    kernel = functools.partial(_fm_kernel, reduce_sum=reduce_sum, num_fields=f)

    # Advisory cost for XLA's scheduler: purely HBM-bandwidth-bound op.
    flops = 3 * b * f * d + 3 * b * d
    bytes_accessed = b * f * d * itemsize + b * out_cols * itemsize

    # TODO(synk): output last-dim=1 (reduce_sum=True) lowers to masked stores;
    # output bytes are negligible vs input, so the lane-dense-output rewrite is
    # skipped to preserve the module's (B, 1) contract.
    return pl.pallas_call(
        kernel,
        out_shape=out_shape,
        grid_spec=pltpu.PrefetchScalarGridSpec(
            num_scalar_prefetch=0,
            grid=grid,
            in_specs=[pl.BlockSpec((tb, f, d), lambda i: (i, 0, 0))],
            out_specs=pl.BlockSpec((tb, out_cols), lambda i: (i, 0)),
        ),
        compiler_params=pltpu.CompilerParams(
            dimension_semantics=("parallel",),      # megacore-shard batch (v7x)
            vmem_limit_bytes=48 * 1024 * 1024,      # > v5e default, < v7x physical
        ),
        cost_estimate=pl.CostEstimate(
            flops=flops, transcendentals=0, bytes_accessed=bytes_accessed),
    )(x)


def _fm_reference(x: jax.Array, reduce_sum: bool = True) -> jax.Array:
    square_of_sum = jnp.sum(x, axis=1) ** 2
    sum_of_square = jnp.sum(x ** 2, axis=1)
    ix = square_of_sum - sum_of_square
    if reduce_sum:
        ix = jnp.sum(ix, axis=1, keepdims=True)
    return 0.5 * ix


if __name__ == "__main__":
    key = jax.random.PRNGKey(0)

    # --- small test, matching the module's (batch, num_fields, embed_dim) ---
    batch, num_fields, embed_dim = 2, 4, 32
    x = jax.random.normal(key, (batch, num_fields, embed_dim), dtype=jnp.float32)

    out = jax.block_until_ready(fm_operation(x, reduce_sum=True))
    ref = _fm_reference(x, reduce_sum=True)
    assert out.shape == (batch, 1), out.shape
    assert jnp.allclose(out, ref, atol=1e-4, rtol=1e-4), (out, ref)

    out2 = jax.block_until_ready(fm_operation(x, reduce_sum=False))
    ref2 = _fm_reference(x, reduce_sum=False)
    assert out2.shape == (batch, embed_dim)
    assert jnp.allclose(out2, ref2, atol=1e-4, rtol=1e-4)

    # --- larger batch exercising the tiled, pipelined grid (multiple blocks) ---
    key2 = jax.random.PRNGKey(1)
    xb = jax.random.normal(key2, (2048, 8, 64), dtype=jnp.float32)
    outb = jax.block_until_ready(fm_operation(xb, reduce_sum=True))
    refb = _fm_reference(xb, reduce_sum=True)
    assert outb.shape == (2048, 1)
    assert jnp.allclose(outb, refb, atol=1e-3, rtol=1e-4)

    print("KERNEL_OK")
</pallas_src>

<mosaic_0001>
module attributes {stable_mosaic.version = 11 : i64} {
  func.func @_fm_kernel(%arg0: i32, %arg1: memref<2x4x32xf32, #tpu.memory_space<vmem>>, %arg2: memref<2x1xf32, #tpu.memory_space<vmem>>) attributes {dimension_semantics = [#tpu.dimension_semantics<parallel>], iteration_bounds = array<i64: 1>, scalar_prefetch = 0 : i64, scratch_operands = 0 : i64, tpu.core_type = #tpu.core_type<tc>, window_params = [{transform_indices = @transform_0, window_bounds = array<i64: 2, 4, 32>}, {transform_indices = @transform_1, window_bounds = array<i64: 2, 1>}]} {
    %c0 = arith.constant 0 : index
    %c0_0 = arith.constant 0 : index
    %c0_1 = arith.constant 0 : index
    %0 = vector.load %arg1[%c0, %c0_0, %c0_1] : memref<2x4x32xf32, #tpu.memory_space<vmem>>, vector<2x1x32xf32>
    %1 = vector.shape_cast %0 : vector<2x1x32xf32> to vector<2x32xf32>
    %2 = arith.mulf %1, %1 : vector<2x32xf32>
    %c0_2 = arith.constant 0 : index
    %c1 = arith.constant 1 : index
    %c0_3 = arith.constant 0 : index
    %3 = vector.load %arg1[%c0_2, %c1, %c0_3] : memref<2x4x32xf32, #tpu.memory_space<vmem>>, vector<2x1x32xf32>
    %4 = vector.shape_cast %3 : vector<2x1x32xf32> to vector<2x32xf32>
    %5 = arith.addf %1, %4 : vector<2x32xf32>
    %6 = arith.mulf %4, %4 : vector<2x32xf32>
    %7 = arith.addf %2, %6 : vector<2x32xf32>
    %c0_4 = arith.constant 0 : index
    %c2 = arith.constant 2 : index
    %c0_5 = arith.constant 0 : index
    %8 = vector.load %arg1[%c0_4, %c2, %c0_5] : memref<2x4x32xf32, #tpu.memory_space<vmem>>, vector<2x1x32xf32>
    %9 = vector.shape_cast %8 : vector<2x1x32xf32> to vector<2x32xf32>
    %10 = arith.addf %5, %9 : vector<2x32xf32>
    %11 = arith.mulf %9, %9 : vector<2x32xf32>
    %12 = arith.addf %7, %11 : vector<2x32xf32>
    %c0_6 = arith.constant 0 : index
    %c3 = arith.constant 3 : index
    %c0_7 = arith.constant 0 : index
    %13 = vector.load %arg1[%c0_6, %c3, %c0_7] : memref<2x4x32xf32, #tpu.memory_space<vmem>>, vector<2x1x32xf32>
    %14 = vector.shape_cast %13 : vector<2x1x32xf32> to vector<2x32xf32>
    %15 = arith.addf %10, %14 : vector<2x32xf32>
    %16 = arith.mulf %14, %14 : vector<2x32xf32>
    %17 = arith.addf %12, %16 : vector<2x32xf32>
    %18 = arith.mulf %15, %15 : vector<2x32xf32>
    %19 = arith.subf %18, %17 : vector<2x32xf32>
    %cst = arith.constant dense<0.000000e+00> : vector<2xf32>
    %20 = vector.multi_reduction <add>, %19, %cst [1] : vector<2x32xf32> to vector<2xf32>
    %21 = vector.shape_cast %20 : vector<2xf32> to vector<2x1xf32>
    %cst_8 = arith.constant 5.000000e-01 : f32
    %22 = vector.broadcast %cst_8 : f32 to vector<2x1xf32>
    %23 = arith.mulf %22, %21 : vector<2x1xf32>
    %c0_9 = arith.constant 0 : index
    %c0_10 = arith.constant 0 : index
    %24 = vector.load %arg2[%c0_9, %c0_10] : memref<2x1xf32, #tpu.memory_space<vmem>>, vector<2x1xf32>
    tpu.vector_store %arg2[%c0_9, %c0_10], %23 {strides = array<i32>} : memref<2x1xf32, #tpu.memory_space<vmem>>, vector<2x1xf32>,
    return
  }
  func.func @transform_0(%arg0: i32) -> (i32, i32, i32) {
    %c0_i32 = arith.constant 0 : i32
    %c0_i32_0 = arith.constant 0 : i32
    %c0_i32_1 = arith.constant 0 : i32
    return %arg0, %c0_i32, %c0_i32_0 : i32, i32, i32
  }
  func.func @transform_1(%arg0: i32) -> (i32, i32) {
    %c0_i32 = arith.constant 0 : i32
    %c0_i32_0 = arith.constant 0 : i32
    return %arg0, %c0_i32 : i32, i32
  }
}

</mosaic_0001>

<llo_original>
// kernel: tpu_custom_call.1
$region0: #{tpu_custom_call.1}
  #allocation0 [shape = 'u32[]', space=smem, size = 0x4, offset = 0x4, fixed_abs, tag = 'smem constant byte address 0x4 - core index']
  #allocation1 [shape = 'u32[144,128]{1,0:T(1,128)}', space=vmem, size = 0x12000, scoped, tag = 'internal scratch']
  %s0 = inlined_call_operand.hbm [shape: f32[2,4,32], index: 0, kind: input, shape index: {}]
  %s1 = inlined_call_operand.vmem [shape: f32[2,1], index: 1, kind: output, shape index: {}]
  %s2 = sld [smem:[#allocation0]]
  $region18: #{tpu_custom_call.1} parent=0
    _
  %s4 = ssub.s32 1, %s2
  %s5 = scalar_select 0, %s4, %s2
  $region1: #{tpu_custom_call.1} parent=0
    #allocation2 [shape = 'u8[4096]{0}', space=vmem, size = 0x1000, scoped, tag = 'input window, operand 0, single buffered']
    #allocation3 [shape = 's32[1]{0}', space=sflag, size = 0x4, scoped, tag = 'scoped memory for tpu_custom_call.1']
    %6 = vsyncpa [#allocation3], 0
    // Predicated region
    $region2: #{tpu_custom_call.1} parent=1 // pred_check
      _
    $region3: #{tpu_custom_call.1} parent=1 // pred_check_branch
      %8 = sbr.rel (0) target = $region5
    $region4: #{tpu_custom_call.1} parent=1 // pred_region
      %s10 = ssub.s32 128, 128
      %11 = vsyncadd [#allocation3], %s10
      %s12 = sshll.u32 [#allocation2], 4
      %s13 = int_to_ptr.vmem [resolvable:$true] %s12
      %18 = dma.hbm_to_vmem [thread:$0]  %s0, 128, %s13, [#allocation3], 64, 64, 4
    $region5: #{tpu_custom_call.1} parent=1 // pred_fallthru
      _
    // Predicated region
    $region6: #{tpu_custom_call.1} parent=1 // pred_check
      _
    $region7: #{tpu_custom_call.1} parent=1 // pred_check_branch
      %20 = sbr.rel (0) target = $region9
    $region8: #{tpu_custom_call.1} parent=1 // pred_region
      %21 = dma.done [#allocation3], 128
    $region9: #{tpu_custom_call.1} parent=1 // pred_fallthru
      _
    %v22 = vld [vmem:[#allocation2] sm:$0x1]
    %v23 = vld [vmem:[#allocation2 + $0x4] sm:$0x1]
    %v24 = vmul.f32 %v22, %v22
    %v25 = vmul.f32 %v23, %v23
    %v26 = vld [vmem:[#allocation2 + $0x1] sm:$0x1]
    %v27 = vld [vmem:[#allocation2 + $0x5] sm:$0x1]
    %v28 = vadd.f32 %v22, %v26
    %v29 = vadd.f32 %v23, %v27
    %v30 = vmul.f32 %v26, %v26
    %v31 = vmul.f32 %v27, %v27
    %v32 = vadd.f32 %v24, %v30
    %v33 = vadd.f32 %v25, %v31
    %v34 = vld [vmem:[#allocation2 + $0x2] sm:$0x1]
    %v35 = vld [vmem:[#allocation2 + $0x6] sm:$0x1]
    %v36 = vadd.f32 %v28, %v34
    %v37 = vadd.f32 %v29, %v35
    %v38 = vmul.f32 %v34, %v34
    %v39 = vmul.f32 %v35, %v35
    %v40 = vadd.f32 %v32, %v38
    %v41 = vadd.f32 %v33, %v39
    %v42 = vld [vmem:[#allocation2 + $0x3] sm:$0x1]
    %v43 = vld [vmem:[#allocation2 + $0x7] sm:$0x1]
    %v44 = vadd.f32 %v36, %v42
    %v45 = vadd.f32 %v37, %v43
    %v46 = vmul.f32 %v42, %v42
    %v47 = vmul.f32 %v43, %v43
    %v48 = vadd.f32 %v40, %v46
    %v49 = vadd.f32 %v41, %v47
    %v50 = vmul.f32 %v44, %v44
    %v51 = vmul.f32 %v45, %v45
    %v52 = vsub.f32 %v50, %v48
    %v53 = vsub.f32 %v51, %v49
    %v56 = vrot.slane %v53, 7
    %vm57 = vcmask 1041409
    %v58 = vsel %vm57, %v56, %v52
    %vm60 = vcmask 254976
    %v61 = vsel %vm60, %v58, 0.0
    %62 = vadd.xlane.f32.xlu0 %v61
    %v63 = vpop.xlane.xlu0 %62
    %v64 = vmul.f32 %v63, 0.5
    %vm65 = vcmask 1024
    %66 = vst.msk [vmem:[%s1] sm:$0x3] %vm65, %v64
    // Predicated region
    $region10: #{tpu_custom_call.1} parent=1 // pred_check
      _
    $region11: #{tpu_custom_call.1} parent=1 // pred_check_branch
      %68 = sbr.rel (0) target = $region13
    $region12: #{tpu_custom_call.1} parent=1 // pred_region
      _
    $region13: #{tpu_custom_call.1} parent=1 // pred_fallthru
      _
    // Predicated region
    $region14: #{tpu_custom_call.1} parent=1 // pred_check
      _
    $region15: #{tpu_custom_call.1} parent=1 // pred_check_branch
      %70 = sbr.rel (0) target = $region17
    $region16: #{tpu_custom_call.1} parent=1 // pred_region
      _
    $region17: #{tpu_custom_call.1} parent=1 // pred_fallthru
      _
    %71 = vsyncpa [#allocation3], 1

</llo_original>
